<compile_context>
chip_gen: v6e
topology: v6e:2x2x1
jax: 0.10.0
libtpu: 0.0.40
codegen_flags: <defaults>
</compile_context>

<pallas_src>
import functools
import math

import jax
import jax.numpy as jnp
from jax.experimental import pallas as pl
from jax.experimental.pallas import tpu as pltpu


def _fuzzy_kernel(x_ref, e_ref, mu_ref, niv_ref, o_ref):
    # x_ref:   (TB, Fn)  folded input rows for this batch tile   (pipelined)
    # e_ref:   (Fn, W)   one-hot gather matrix E[k, c] = (c // r == k)  (resident)
    # mu_ref:  (1,  W)   lane-folded flattened centers            (resident)
    # niv_ref: (1,  W)   lane-folded flattened -1/sigma^2         (resident)
    # o_ref:   (TB, W)   lane-dense output tile
    #
    # Exact gather on the MXU: x_exp[t, c] = x[t, c // r].  The one-hot matmul
    # at HIGHEST precision is bit-exact (x[k]*1 plus a sum of zeros) and keeps
    # the VALU/XLU/EUP slots free for the subtract / square / exp.
    x_exp = jnp.dot(
        x_ref[...], e_ref[...],
        preferred_element_type=jnp.float32,
        precision=jax.lax.Precision.HIGHEST,
    )
    d = x_exp - mu_ref[...]                 # (1, W) broadcasts over sublanes
    o_ref[...] = jnp.exp(d * d * niv_ref[...]).astype(o_ref.dtype)


@functools.partial(jax.jit, static_argnames=("block_b", "out_dtype"))
def fuzzy_layer(x, mu, sigma, *, block_b=4096, out_dtype=jnp.float32):
    """Gaussian membership evaluation: exp(-(x - mu)^2 / sigma^2).

    x:     (B, n) float32
    mu:    (n, r) float32
    sigma: (n, r) float32
    returns (B, n, r) in `out_dtype` (float32 by default, matching the module)
    """
    B, n = x.shape
    r = mu.shape[1]
    assert mu.shape == (n, r) and sigma.shape == (n, r)
    nr = n * r

    # ---- lane fold: make the output lane width a multiple of 128 when we can.
    # Smallest F with (F * n * r) % 128 == 0; cap F so the one-hot matmul's
    # contraction depth (F*n) stays shallow, and require F | B.
    F = 128 // math.gcd(nr, 128)
    if F > 64 or B % F != 0:
        F = 1                                  # fallback: correct, masked stores
    W = F * nr                                 # kernel output lane width
    Bf = B // F                                # folded batch extent
    Fn = F * n                                 # folded input width

    # ---- batch-tile rows: target ~2 MiB f32 output blocks (85%+ of HBM
    # roofline on v5e/v6e/v7x and under v5e's 16 MiB scoped VMEM with double
    # buffering), but keep >= ~4 grid steps when the batch allows so the
    # "parallel" axis can shard across both TensorCores on v7x.
    if Bf <= 8:
        tb = Bf
    else:
        target_rows = max(8, ((2 << 20) // (4 * W)) // 8 * 8)
        tb = min(block_b, target_rows, Bf)
        if Bf >= 32 and Bf // tb < 4:
            tb = min(tb, ((Bf + 3) // 4 + 7) // 8 * 8)
        if tb < Bf:
            tb = max(8, (tb // 8) * 8)

    # ---- tiny wrapper-side parameter transforms (hoisted out of the kernel).
    x_f = x.reshape(Bf, Fn)                    # contiguous fold, metadata-only
    mu_w = jnp.tile(mu.reshape(1, nr), (1, F))
    niv_w = jnp.tile((-1.0 / (sigma * sigma)).reshape(1, nr), (1, F))
    col_k = jnp.arange(W, dtype=jnp.int32) // r
    e = (col_k[None, :] == jnp.arange(Fn, dtype=jnp.int32)[:, None]).astype(jnp.float32)

    cost = pl.CostEstimate(
        flops=2 * B * n * W + 3 * B * nr,        # one-hot matmul + sub/mul/mul
        transcendentals=B * nr,                  # exp
        bytes_accessed=4 * (B * n + Fn * W + 2 * nr)
        + B * nr * jnp.dtype(out_dtype).itemsize,
    )

    out_flat = pl.pallas_call(
        _fuzzy_kernel,
        out_shape=jax.ShapeDtypeStruct((Bf, W), out_dtype),
        grid=(pl.cdiv(Bf, tb),),
        in_specs=[
            pl.BlockSpec((tb, Fn), lambda i: (i, 0)),   # x tile, pipelined
            pl.BlockSpec((Fn, W), lambda i: (0, 0)),    # one-hot E, resident
            pl.BlockSpec((1, W), lambda i: (0, 0)),     # mu, resident
            pl.BlockSpec((1, W), lambda i: (0, 0)),     # -1/sigma^2, resident
        ],
        out_specs=pl.BlockSpec((tb, W), lambda i: (i, 0)),
        compiler_params=pltpu.CompilerParams(
            dimension_semantics=("parallel",),          # megacore sharding on v7x
        ),
        cost_estimate=cost,
    )(x_f, e, mu_w, niv_w)

    # Free reshape back to the module's (B, n, r) output layout.
    return out_flat.reshape(B, n, r).astype(out_dtype)


def fuzzy_layer_ref(x, mu, sigma):
    # Pure-JAX reference identical to the PyTorch forward.
    diff = x[:, :, None] - mu[None, :, :]
    return jnp.exp(-(diff * diff) / (sigma * sigma)[None, :, :])


if __name__ == "__main__":
    key = jax.random.PRNGKey(0)
    kx, kmu, ksig, kx2, kmu2, ksig2 = jax.random.split(key, 6)

    # Case 1: lane-dense fold path (n*r=64 folds to a 128-lane output),
    # multi-step "parallel" grid (4 steps at this demo size).
    B, n, r = 64, 4, 16
    x = jax.random.normal(kx, (B, n), dtype=jnp.float32)
    mu = jax.random.normal(kmu, (n, r), dtype=jnp.float32)
    sigma = jax.random.uniform(ksig, (n, r), dtype=jnp.float32,
                               minval=0.5, maxval=2.0)
    out = jax.block_until_ready(fuzzy_layer(x, mu, sigma))
    ref = fuzzy_layer_ref(x, mu, sigma)
    assert out.shape == (B, n, r)
    assert jnp.allclose(out, ref, atol=1e-5, rtol=1e-5)

    # Case 2: F=1 fallback (n*r=15 cannot fold to a multiple of 128) plus a
    # partial last batch tile (masked stores) -- exercises the non-happy path.
    B2, n2, r2 = 20, 3, 5
    x2 = jax.random.normal(kx2, (B2, n2), dtype=jnp.float32)
    mu2 = jax.random.normal(kmu2, (n2, r2), dtype=jnp.float32)
    sigma2 = jax.random.uniform(ksig2, (n2, r2), dtype=jnp.float32,
                                minval=0.5, maxval=2.0)
    out2 = jax.block_until_ready(fuzzy_layer(x2, mu2, sigma2, block_b=8))
    ref2 = fuzzy_layer_ref(x2, mu2, sigma2)
    assert out2.shape == (B2, n2, r2)
    assert jnp.allclose(out2, ref2, atol=1e-5, rtol=1e-5)

    print("KERNEL_OK")
</pallas_src>

<mosaic_0001>
module attributes {stable_mosaic.version = 11 : i64} {
  func.func @_fuzzy_kernel(%arg0: i32, %arg1: memref<8x8xf32, #tpu.memory_space<vmem>>, %arg2: memref<8x128xf32, #tpu.memory_space<vmem>>, %arg3: memref<1x128xf32, #tpu.memory_space<vmem>>, %arg4: memref<1x128xf32, #tpu.memory_space<vmem>>, %arg5: memref<8x128xf32, #tpu.memory_space<vmem>>) attributes {dimension_semantics = [#tpu.dimension_semantics<parallel>], iteration_bounds = array<i64: 4>, scalar_prefetch = 0 : i64, scratch_operands = 0 : i64, tpu.core_type = #tpu.core_type<tc>, window_params = [{transform_indices = @transform_0, window_bounds = array<i64: 8, 8>}, {pipeline_mode = #tpu.pipeline_mode<synchronous>, transform_indices = @transform_1, window_bounds = array<i64: 8, 128>}, {pipeline_mode = #tpu.pipeline_mode<synchronous>, transform_indices = @transform_2, window_bounds = array<i64: 1, 128>}, {pipeline_mode = #tpu.pipeline_mode<synchronous>, transform_indices = @transform_3, window_bounds = array<i64: 1, 128>}, {transform_indices = @transform_4, window_bounds = array<i64: 8, 128>}]} {
    %c0 = arith.constant 0 : index
    %c0_0 = arith.constant 0 : index
    %0 = vector.load %arg1[%c0, %c0_0] : memref<8x8xf32, #tpu.memory_space<vmem>>, vector<8x8xf32>
    %c0_1 = arith.constant 0 : index
    %c0_2 = arith.constant 0 : index
    %1 = vector.load %arg2[%c0_1, %c0_2] : memref<8x128xf32, #tpu.memory_space<vmem>>, vector<8x128xf32>
    %cst = arith.constant dense<0.000000e+00> : vector<8x128xf32>
    %2 = tpu.matmul %0, %1, %cst {dimension_numbers = #tpu.dot_dimension_numbers<[1], [0], [0], [1], [0, 0, 1, 1], [], []>, precision = #tpu.contract_precision<fp32>} : vector<8x8xf32>, vector<8x128xf32>, vector<8x128xf32> -> vector<8x128xf32>
    %c0_3 = arith.constant 0 : index
    %c0_4 = arith.constant 0 : index
    %3 = vector.load %arg3[%c0_3, %c0_4] : memref<1x128xf32, #tpu.memory_space<vmem>>, vector<1x128xf32>
    %4 = vector.broadcast %3 : vector<1x128xf32> to vector<8x128xf32>
    %5 = arith.subf %2, %4 : vector<8x128xf32>
    %6 = arith.mulf %5, %5 : vector<8x128xf32>
    %c0_5 = arith.constant 0 : index
    %c0_6 = arith.constant 0 : index
    %7 = vector.load %arg4[%c0_5, %c0_6] : memref<1x128xf32, #tpu.memory_space<vmem>>, vector<1x128xf32>
    %8 = vector.broadcast %7 : vector<1x128xf32> to vector<8x128xf32>
    %9 = arith.mulf %6, %8 : vector<8x128xf32>
    %10 = math.exp %9 : vector<8x128xf32>
    %c0_7 = arith.constant 0 : index
    %c0_8 = arith.constant 0 : index
    %11 = vector.load %arg5[%c0_7, %c0_8] : memref<8x128xf32, #tpu.memory_space<vmem>>, vector<8x128xf32>
    tpu.vector_store %arg5[%c0_7, %c0_8], %10 {strides = array<i32>} : memref<8x128xf32, #tpu.memory_space<vmem>>, vector<8x128xf32>,
    return
  }
  func.func @transform_0(%arg0: i32) -> (i32, i32) {
    %c0_i32 = arith.constant 0 : i32
    %c0_i32_0 = arith.constant 0 : i32
    return %arg0, %c0_i32 : i32, i32
  }
  func.func @transform_1(%arg0: i32) -> (i32, i32) {
    %c0_i32 = arith.constant 0 : i32
    %c0_i32_0 = arith.constant 0 : i32
    %c0_i32_1 = arith.constant 0 : i32
    return %c0_i32, %c0_i32_0 : i32, i32
  }
  func.func @transform_2(%arg0: i32) -> (i32, i32) {
    %c0_i32 = arith.constant 0 : i32
    %c0_i32_0 = arith.constant 0 : i32
    %c0_i32_1 = arith.constant 0 : i32
    return %c0_i32, %c0_i32_0 : i32, i32
  }
  func.func @transform_3(%arg0: i32) -> (i32, i32) {
    %c0_i32 = arith.constant 0 : i32
    %c0_i32_0 = arith.constant 0 : i32
    %c0_i32_1 = arith.constant 0 : i32
    return %c0_i32, %c0_i32_0 : i32, i32
  }
  func.func @transform_4(%arg0: i32) -> (i32, i32) {
    %c0_i32 = arith.constant 0 : i32
    %c0_i32_0 = arith.constant 0 : i32
    return %arg0, %c0_i32 : i32, i32
  }
}

</mosaic_0001>

<llo_original>
// kernel: fuzzy_layer.1
$region0: #{fuzzy_layer.1}
  #allocation0 [shape = 'u32[]', space=smem, size = 0x4, offset = 0x4, fixed_abs, tag = 'smem constant byte address 0x4 - core index']
  #allocation1 [shape = 'u32[144,128]{1,0:T(1,128)}', space=vmem, size = 0x12000, scoped, tag = 'internal scratch']
  %s0 = inlined_call_operand.vmem [shape: f32[32,8], index: 0, kind: input, shape index: {}]
  %s1 = inlined_call_operand.vmem [shape: f32[8,128], index: 1, kind: input, shape index: {}]
  %s2 = inlined_call_operand.vmem [shape: f32[1,128], index: 2, kind: input, shape index: {}]
  %s3 = inlined_call_operand.vmem [shape: f32[1,128], index: 3, kind: input, shape index: {}]
  %s4 = inlined_call_operand.vmem [shape: f32[32,128], index: 4, kind: output, shape index: {}]
  %s5 = sld [smem:[#allocation0]]
  $region49: #{fuzzy_layer.1} parent=0
    _
  %s7 = ssub.s32 1, %s5
  %s8 = scalar_select 0, %s7, %s5
  loop: start=0, step=1, limit=6
  $region2: #{fuzzy_layer.1} parent=0 // loop_pre_header
    _
  $region3: #{fuzzy_layer.1} parent=0 // loop_header
    %s10 = sphi 0, %s14
    %p11 = scmp.ge.s32.totalorder %s10, 6
    %s20 = sphi 0, %s22
    %s23 = sphi 0, %s20
    %s24 = sphi 0, %s23
    %s40 = sphi 0, %s24
    %s44 = sphi 0, %s44
    %s46 = sphi 0, %s44
    %s47 = sphi 0, %s46
    %s61 = sphi 0, %s47
    %s65 = sphi 0, %s65
    %s67 = sphi 0, %s65
    %s68 = sphi 0, %s67
    %s82 = sphi 0, %s68
    %s86 = sphi 0, %s86
    %s88 = sphi 0, %s86
    %s89 = sphi 0, %s88
    %s103 = sphi 0, %s89
    %s109 = sphi 0, %s111
    %s112 = sphi 0, %s109
    %s113 = sphi 0, %s112
    %s129 = sphi 0, %s113
  $region4: #{fuzzy_layer.1} parent=0 // loop_header_branch
    %13 = sbr.rel (%p11) target = $region8
  $region5: #{fuzzy_layer.1} parent=0 // loop_body
    %s15 = ssub.s32 %s10, 1
    %s16 = ssub.s32 %s10, 2
    %s17 = sadd.s32 %s10, 1
    %s18 = ssub.s32 %s10, %s17
    %p19 = scmp.eq.s32.totalorder %s18, 0
    %s21 = sadd.s32 %s20, 1
    %s22 = scalar_select %p19, %s20, %s21
    %p25 = pneg %p19
    %p26 = scmp.eq.s32.totalorder %s10, 3
    %p27 = por %p25, %p26
    %p28 = scmp.ne.s32.totalorder %s20, %s23
    %p29 = scmp.eq.s32.totalorder %s10, 0
    %p30 = por %p28, %p29
    %p31 = scmp.ne.s32.totalorder %s20, %s23
    %p32 = scmp.eq.s32.totalorder %s15, 3
    %p33 = por %p31, %p32
    %p34 = scmp.ne.s32.totalorder %s23, %s24
    %p35 = scmp.eq.s32.totalorder %s15, 0
    %p36 = por %p34, %p35
    %p37 = scmp.ne.s32.totalorder %s23, %s24
    %p38 = scmp.eq.s32.totalorder %s16, 3
    %p39 = por %p37, %p38
    %p41 = scmp.ne.s32.totalorder %s24, %s40
    %p42 = scmp.eq.s32.totalorder %s16, 0
    %p43 = por %p41, %p42
    %s45 = sadd.s32 %s44, 1
    %p48 = scmp.eq.s32.totalorder %s10, 3
    %p49 = scmp.ne.s32.totalorder %s44, %s46
    %p50 = scmp.eq.s32.totalorder %s10, 0
    %p51 = por %p49, %p50
    %p52 = scmp.ne.s32.totalorder %s44, %s46
    %p53 = scmp.eq.s32.totalorder %s15, 3
    %p54 = por %p52, %p53
    %p55 = scmp.ne.s32.totalorder %s46, %s47
    %p56 = scmp.eq.s32.totalorder %s15, 0
    %p57 = por %p55, %p56
    %p58 = scmp.ne.s32.totalorder %s46, %s47
    %p59 = scmp.eq.s32.totalorder %s16, 3
    %p60 = por %p58, %p59
    %p62 = scmp.ne.s32.totalorder %s47, %s61
    %p63 = scmp.eq.s32.totalorder %s16, 0
    %p64 = por %p62, %p63
    %s66 = sadd.s32 %s65, 1
    %p69 = scmp.eq.s32.totalorder %s10, 3
    %p70 = scmp.ne.s32.totalorder %s65, %s67
    %p71 = scmp.eq.s32.totalorder %s10, 0
    %p72 = por %p70, %p71
    %p73 = scmp.ne.s32.totalorder %s65, %s67
    %p74 = scmp.eq.s32.totalorder %s15, 3
    %p75 = por %p73, %p74
    %p76 = scmp.ne.s32.totalorder %s67, %s68
    %p77 = scmp.eq.s32.totalorder %s15, 0
    %p78 = por %p76, %p77
    %p79 = scmp.ne.s32.totalorder %s67, %s68
    %p80 = scmp.eq.s32.totalorder %s16, 3
    %p81 = por %p79, %p80
    %p83 = scmp.ne.s32.totalorder %s68, %s82
    %p84 = scmp.eq.s32.totalorder %s16, 0
    %p85 = por %p83, %p84
    %s87 = sadd.s32 %s86, 1
    %p90 = scmp.eq.s32.totalorder %s10, 3
    %p91 = scmp.ne.s32.totalorder %s86, %s88
    %p92 = scmp.eq.s32.totalorder %s10, 0
    %p93 = por %p91, %p92
    %p94 = scmp.ne.s32.totalorder %s86, %s88
    %p95 = scmp.eq.s32.totalorder %s15, 3
    %p96 = por %p94, %p95
    %p97 = scmp.ne.s32.totalorder %s88, %s89
    %p98 = scmp.eq.s32.totalorder %s15, 0
    %p99 = por %p97, %p98
    %p100 = scmp.ne.s32.totalorder %s88, %s89
    %p101 = scmp.eq.s32.totalorder %s16, 3
    %p102 = por %p100, %p101
    %p104 = scmp.ne.s32.totalorder %s89, %s103
    %p105 = scmp.eq.s32.totalorder %s16, 0
    %p106 = por %p104, %p105
    %s107 = ssub.s32 %s10, %s17
    %p108 = scmp.eq.s32.totalorder %s107, 0
    %s110 = sadd.s32 %s109, 1
    %s111 = scalar_select %p108, %s109, %s110
    %p114 = pneg %p108
    %p115 = scmp.eq.s32.totalorder %s10, 3
    %p116 = por %p114, %p115
    %p117 = scmp.ne.s32.totalorder %s109, %s112
    %p118 = scmp.eq.s32.totalorder %s10, 0
    %p119 = por %p117, %p118
    %p120 = scmp.ne.s32.totalorder %s109, %s112
    %p121 = scmp.eq.s32.totalorder %s15, 3
    %p122 = por %p120, %p121
    %p123 = scmp.ne.s32.totalorder %s112, %s113
    %p124 = scmp.eq.s32.totalorder %s15, 0
    %p125 = por %p123, %p124
    %p126 = scmp.ne.s32.totalorder %s112, %s113
    %p127 = scmp.eq.s32.totalorder %s16, 3
    %p128 = por %p126, %p127
    %p130 = scmp.ne.s32.totalorder %s113, %s129
    %p131 = scmp.eq.s32.totalorder %s16, 0
    %p132 = por %p130, %p131
    %p133 = scmp.le.s32.totalorder 1, %s10
    %p134 = scmp.lt.s32.totalorder %s10, 5
    %p135 = pnand %p133, %p134
    %p136 = pneg %p135
    // Predicated region
    $region9: #{fuzzy_layer.1} parent=5 // pred_check
      _
    $region10: #{fuzzy_layer.1} parent=5 // pred_check_branch
      %138 = sbr.rel (%p135) target = $region12
    $region11: #{fuzzy_layer.1} parent=5 // pred_region
      %s139 = ssub.s32 %s10, 1
      // Predicated region
      $region13: #{fuzzy_layer.1} parent=11 // pred_check
        %p140 = pneg %p57
      $region14: #{fuzzy_layer.1} parent=11 // pred_check_branch
        %142 = sbr.rel (%p140) target = $region16
      $region15: #{fuzzy_layer.1} parent=11 // pred_region
        _
      $region16: #{fuzzy_layer.1} parent=11 // pred_fallthru
        _
      // Predicated region
      $region17: #{fuzzy_layer.1} parent=11 // pred_check
        %p143 = pneg %p78
      $region18: #{fuzzy_layer.1} parent=11 // pred_check_branch
        %145 = sbr.rel (%p143) target = $region20
      $region19: #{fuzzy_layer.1} parent=11 // pred_region
        _
      $region20: #{fuzzy_layer.1} parent=11 // pred_fallthru
        _
      // Predicated region
      $region21: #{fuzzy_layer.1} parent=11 // pred_check
        %p146 = pneg %p99
      $region22: #{fuzzy_layer.1} parent=11 // pred_check_branch
        %148 = sbr.rel (%p146) target = $region24
      $region23: #{fuzzy_layer.1} parent=11 // pred_region
        _
      $region24: #{fuzzy_layer.1} parent=11 // pred_fallthru
        _
    $region12: #{fuzzy_layer.1} parent=5 // pred_fallthru
      _
    %p149 = scmp.lt.s32.totalorder %s10, 4
    // Predicated region
    $region25: #{fuzzy_layer.1} parent=5 // pred_check
      %p150 = pneg %p149
    $region26: #{fuzzy_layer.1} parent=5 // pred_check_branch
      %152 = sbr.rel (%p150) target = $region28
    $region27: #{fuzzy_layer.1} parent=5 // pred_region
      // Predicated region
      $region29: #{fuzzy_layer.1} parent=27 // pred_check
        %p153 = pneg %p30
      $region30: #{fuzzy_layer.1} parent=27 // pred_check_branch
        %155 = sbr.rel (%p153) target = $region32
      $region31: #{fuzzy_layer.1} parent=27 // pred_region
        %p156 = scmp.lt.s32.totalorder %s10, 3
        %s157 = scalar_select %p156, %s10, 3
        %s158 = smul.addr %s157, 8
        %s159 = scalar_lea.vmem %s0, %s158
      $region32: #{fuzzy_layer.1} parent=27 // pred_fallthru
        _
    $region28: #{fuzzy_layer.1} parent=5 // pred_fallthru
      _
    %p160 = scmp.le.s32.totalorder 1, %s10
    %p161 = scmp.lt.s32.totalorder %s10, 5
    %p162 = pnand %p160, %p161
    %p163 = pneg %p162
    // Predicated region
    $region33: #{fuzzy_layer.1} parent=5 // pred_check
      _
    $region34: #{fuzzy_layer.1} parent=5 // pred_check_branch
      %165 = sbr.rel (%p162) target = $region36
    $region35: #{fuzzy_layer.1} parent=5 // pred_region
      %s166 = ssub.s32 %s10, 1
      %p167 = scmp.lt.s32.totalorder %s15, 3
      %s168 = scalar_select %p167, %s15, 3
      %s169 = smul.addr %s168, 8
      %s170 = scalar_lea.vmem %s0, %s169
      %p171 = pneg %p36
      %p172 = pneg %p33
      %p173 = pneg %p57
      %p174 = pneg %p54
      %p175 = pneg %p78
      %p176 = pneg %p75
      %p177 = pneg %p99
      %p178 = pneg %p96
      %p179 = pneg %p125
      %p180 = pneg %p122
      %p181 = scmp.lt.s32.totalorder %s15, 3
      %s182 = scalar_select %p181, %s15, 3
      %s183 = smul.addr %s182, 8
      %s184 = scalar_lea.vmem %s4, %s183
      %p185 = scmp.lt.s32.totalorder %s15, 3
      %s186 = scalar_select %p185, %s15, 3
      %s187 = smul.addr %s186, 8
      %s188 = scalar_lea.vmem %s0, %s187
      %p189 = scmp.lt.s32.totalorder %s15, 3
      %s190 = scalar_select %p189, %s15, 3
      %s191 = smul.addr %s190, 8
      %s192 = scalar_lea.vmem %s4, %s191
      %v193 = vld [vmem:[%s188] sm:$0xff]
      %v194 = vld [vmem:[%s1] sm:$0xff]
      %vm195 = vcmask 64512
      %v197 = vsel %vm195, %v193, 0
      %199 = vmatprep.subr.mxu0 0.0
      %200 = vmatpush1.msra.mxu0 0.0
      %201 = vmatprep.subr.mxu0 0.0
      %202 = vmatpush1.msra.mxu0 0.0
      %203 = vmatprep.subr.mxu0 0.0
      %204 = vmatpush1.msra.mxu0 0.0
      %205 = vmatprep.subr.mxu0 0.0
      %206 = vmatpush1.msra.mxu0 0.0
      %207 = vmatprep.subr.mxu0 0.0
      %208 = vmatpush1.msra.mxu0 0.0
      %209 = vmatprep.subr.mxu0 0.0
      %210 = vmatpush1.msra.mxu0 0.0
      %211 = vmatprep.subr.mxu0 0.0
      %212 = vmatpush1.msra.mxu0 0.0
      %213 = vmatprep.subr.mxu0 0.0
      %214 = vmatpush1.msra.mxu0 0.0
      %215 = vmatprep.subr.mxu0 0.0
      %216 = vmatpush1.msra.mxu0 0.0
      %217 = vmatprep.subr.mxu0 0.0
      %218 = vmatpush1.msra.mxu0 0.0
      %219 = vmatprep.subr.mxu0 0.0
      %220 = vmatpush1.msra.mxu0 0.0
      %221 = vmatprep.subr.mxu0 0.0
      %222 = vmatpush1.msra.mxu0 0.0
      %223 = vmatprep.subr.mxu0 0.0
      %224 = vmatpush1.msra.mxu0 0.0
      %225 = vmatprep.subr.mxu0 0.0
      %226 = vmatpush1.msra.mxu0 0.0
      %227 = vmatprep.subr.mxu0 0.0
      %228 = vmatpush1.msra.mxu0 0.0
      %229 = vmatprep.subr.mxu0 0.0
      %v230 = vand.u32 %v194, 4294901760
      %231 = vmatpush1.msra.mxu0 %v230
      %232 = vmatprep.subr.mxu0 0.0
      %233 = vmatpush2.msra.mxu0 0.0
      %234 = vmatprep.subr.mxu0 0.0
      %235 = vmatpush2.msra.mxu0 0.0
      %236 = vmatprep.subr.mxu0 0.0
      %237 = vmatpush2.msra.mxu0 0.0
      %238 = vmatprep.subr.mxu0 0.0
      %239 = vmatpush2.msra.mxu0 0.0
      %240 = vmatprep.subr.mxu0 0.0
      %241 = vmatpush2.msra.mxu0 0.0
      %242 = vmatprep.subr.mxu0 0.0
      %243 = vmatpush2.msra.mxu0 0.0
      %244 = vmatprep.subr.mxu0 0.0
      %245 = vmatpush2.msra.mxu0 0.0
      %246 = vmatprep.subr.mxu0 0.0
      %247 = vmatpush2.msra.mxu0 0.0
      %248 = vmatprep.subr.mxu0 0.0
      %249 = vmatpush2.msra.mxu0 0.0
      %250 = vmatprep.subr.mxu0 0.0
      %251 = vmatpush2.msra.mxu0 0.0
      %252 = vmatprep.subr.mxu0 0.0
      %253 = vmatpush2.msra.mxu0 0.0
      %254 = vmatprep.subr.mxu0 0.0
      %255 = vmatpush2.msra.mxu0 0.0
      %256 = vmatprep.subr.mxu0 0.0
      %257 = vmatpush2.msra.mxu0 0.0
      %258 = vmatprep.subr.mxu0 0.0
      %259 = vmatpush2.msra.mxu0 0.0
      %260 = vmatprep.subr.mxu0 0.0
      %261 = vmatpush2.msra.mxu0 0.0
      %262 = vmatprep.subr.mxu0 0.0
      %263 = vmatpush2.msra.mxu0 0.0
      %264 = vmatprep.mubr.f32.mxu0 0.0
      %v265 = vand.u32 %v197, 4294901760
      %v266 = vsub.f32 %v197, %v265
      %v267 = vand.u32 %v266, 4294901760
      %v268 = vsub.f32 %v266, %v267
      %v269 = vand.u32 %v268, 4294901760
      %270 = vmatmul.mubr.f32.gmra.mxu0 %v269
      %v271 = vpop.f32.mrf.mxu0
      %v272 = vadd.f32 0.0, %v271
      %v273 = vpop.f32.mrf.mxu0
      %274 = vdwg.mxu0
      %275 = vmatprep.subr.mxu0 0.0
      %276 = vmatpush1.msra.mxu0 0.0
      %277 = vmatprep.subr.mxu0 0.0
      %278 = vmatpush1.msra.mxu0 0.0
      %279 = vmatprep.subr.mxu0 0.0
      %280 = vmatpush1.msra.mxu0 0.0
      %281 = vmatprep.subr.mxu0 0.0
      %282 = vmatpush1.msra.mxu0 0.0
      %283 = vmatprep.subr.mxu0 0.0
      %284 = vmatpush1.msra.mxu0 0.0
      %285 = vmatprep.subr.mxu0 0.0
      %286 = vmatpush1.msra.mxu0 0.0
      %287 = vmatprep.subr.mxu0 0.0
      %288 = vmatpush1.msra.mxu0 0.0
      %289 = vmatprep.subr.mxu0 0.0
      %290 = vmatpush1.msra.mxu0 0.0
      %291 = vmatprep.subr.mxu0 0.0
      %292 = vmatpush1.msra.mxu0 0.0
      %293 = vmatprep.subr.mxu0 0.0
      %294 = vmatpush1.msra.mxu0 0.0
      %295 = vmatprep.subr.mxu0 0.0
      %296 = vmatpush1.msra.mxu0 0.0
      %297 = vmatprep.subr.mxu0 0.0
      %298 = vmatpush1.msra.mxu0 0.0
      %299 = vmatprep.subr.mxu0 0.0
      %300 = vmatpush1.msra.mxu0 0.0
      %301 = vmatprep.subr.mxu0 0.0
      %302 = vmatpush1.msra.mxu0 0.0
      %303 = vmatprep.subr.mxu0 0.0
      %304 = vmatpush1.msra.mxu0 0.0
      %305 = vmatprep.subr.mxu0 0.0
      %v306 = vand.u32 %v194, 4294901760
      %v307 = vsub.f32 %v194, %v306
      %v308 = vand.u32 %v307, 4294901760
      %v309 = vsub.f32 %v307, %v308
      %v310 = vand.u32 %v309, 4294901760
      %311 = vmatpush1.msra.mxu0 %v310
      %312 = vmatprep.subr.mxu0 0.0
      %313 = vmatpush2.msra.mxu0 0.0
      %314 = vmatprep.subr.mxu0 0.0
      %315 = vmatpush2.msra.mxu0 0.0
      %316 = vmatprep.subr.mxu0 0.0
      %317 = vmatpush2.msra.mxu0 0.0
      %318 = vmatprep.subr.mxu0 0.0
      %319 = vmatpush2.msra.mxu0 0.0
      %320 = vmatprep.subr.mxu0 0.0
      %321 = vmatpush2.msra.mxu0 0.0
      %322 = vmatprep.subr.mxu0 0.0
      %323 = vmatpush2.msra.mxu0 0.0
      %324 = vmatprep.subr.mxu0 0.0
      %325 = vmatpush2.msra.mxu0 0.0
      %326 = vmatprep.subr.mxu0 0.0
      %327 = vmatpush2.msra.mxu0 0.0
      %328 = vmatprep.subr.mxu0 0.0
      %329 = vmatpush2.msra.mxu0 0.0
      %330 = vmatprep.subr.mxu0 0.0
      %331 = vmatpush2.msra.mxu0 0.0
      %332 = vmatprep.subr.mxu0 0.0
      %333 = vmatpush2.msra.mxu0 0.0
      %334 = vmatprep.subr.mxu0 0.0
      %335 = vmatpush2.msra.mxu0 0.0
      %336 = vmatprep.subr.mxu0 0.0
      %337 = vmatpush2.msra.mxu0 0.0
      %338 = vmatprep.subr.mxu0 0.0
      %339 = vmatpush2.msra.mxu0 0.0
      %340 = vmatprep.subr.mxu0 0.0
      %341 = vmatpush2.msra.mxu0 0.0
      %342 = vmatprep.subr.mxu0 0.0
      %343 = vmatpush2.msra.mxu0 0.0
      %344 = vmatprep.mubr.f32.mxu0 0.0
      %v345 = vand.u32 %v197, 4294901760
      %346 = vmatmul.mubr.f32.gmra.mxu0 %v345
      %v347 = vpop.f32.mrf.mxu0
      %v348 = vadd.f32 %v272, %v347
      %v349 = vpop.f32.mrf.mxu0
      %350 = vdwg.mxu0
      %351 = vmatprep.subr.mxu0 0.0
      %352 = vmatpush1.msra.mxu0 0.0
      %353 = vmatprep.subr.mxu0 0.0
      %354 = vmatpush1.msra.mxu0 0.0
      %355 = vmatprep.subr.mxu0 0.0
      %356 = vmatpush1.msra.mxu0 0.0
      %357 = vmatprep.subr.mxu0 0.0
      %358 = vmatpush1.msra.mxu0 0.0
      %359 = vmatprep.subr.mxu0 0.0
      %360 = vmatpush1.msra.mxu0 0.0
      %361 = vmatprep.subr.mxu0 0.0
      %362 = vmatpush1.msra.mxu0 0.0
      %363 = vmatprep.subr.mxu0 0.0
      %364 = vmatpush1.msra.mxu0 0.0
      %365 = vmatprep.subr.mxu0 0.0
      %366 = vmatpush1.msra.mxu0 0.0
      %367 = vmatprep.subr.mxu0 0.0
      %368 = vmatpush1.msra.mxu0 0.0
      %369 = vmatprep.subr.mxu0 0.0
      %370 = vmatpush1.msra.mxu0 0.0
      %371 = vmatprep.subr.mxu0 0.0
      %372 = vmatpush1.msra.mxu0 0.0
      %373 = vmatprep.subr.mxu0 0.0
      %374 = vmatpush1.msra.mxu0 0.0
      %375 = vmatprep.subr.mxu0 0.0
      %376 = vmatpush1.msra.mxu0 0.0
      %377 = vmatprep.subr.mxu0 0.0
      %378 = vmatpush1.msra.mxu0 0.0
      %379 = vmatprep.subr.mxu0 0.0
      %380 = vmatpush1.msra.mxu0 0.0
      %381 = vmatprep.subr.mxu0 0.0
      %v382 = vand.u32 %v194, 4294901760
      %v383 = vsub.f32 %v194, %v382
      %384 = vmatpush1.msra.mxu0 %v383
      %385 = vmatprep.subr.mxu0 0.0
      %386 = vmatpush2.msra.mxu0 0.0
      %387 = vmatprep.subr.mxu0 0.0
      %388 = vmatpush2.msra.mxu0 0.0
      %389 = vmatprep.subr.mxu0 0.0
      %390 = vmatpush2.msra.mxu0 0.0
      %391 = vmatprep.subr.mxu0 0.0
      %392 = vmatpush2.msra.mxu0 0.0
      %393 = vmatprep.subr.mxu0 0.0
      %394 = vmatpush2.msra.mxu0 0.0
      %395 = vmatprep.subr.mxu0 0.0
      %396 = vmatpush2.msra.mxu0 0.0
      %397 = vmatprep.subr.mxu0 0.0
      %398 = vmatpush2.msra.mxu0 0.0
      %399 = vmatprep.subr.mxu0 0.0
      %400 = vmatpush2.msra.mxu0 0.0
      %401 = vmatprep.subr.mxu0 0.0
      %402 = vmatpush2.msra.mxu0 0.0
      %403 = vmatprep.subr.mxu0 0.0
      %404 = vmatpush2.msra.mxu0 0.0
      %405 = vmatprep.subr.mxu0 0.0
      %406 = vmatpush2.msra.mxu0 0.0
      %407 = vmatprep.subr.mxu0 0.0
      %408 = vmatpush2.msra.mxu0 0.0
      %409 = vmatprep.subr.mxu0 0.0
      %410 = vmatpush2.msra.mxu0 0.0
      %411 = vmatprep.subr.mxu0 0.0
      %412 = vmatpush2.msra.mxu0 0.0
      %413 = vmatprep.subr.mxu0 0.0
      %414 = vmatpush2.msra.mxu0 0.0
      %415 = vmatprep.subr.mxu0 0.0
      %416 = vmatpush2.msra.mxu0 0.0
      %417 = vmatprep.mubr.f32.mxu0 0.0
      %v418 = vand.u32 %v197, 4294901760
      %v419 = vsub.f32 %v197, %v418
      %420 = vmatmul.mubr.f32.gmra.mxu0 %v419
      %v421 = vpop.f32.mrf.mxu0
      %v422 = vadd.f32 %v348, %v421
      %v423 = vpop.f32.mrf.mxu0
      %424 = vdwg.mxu0
      %425 = vmatprep.subr.mxu0 0.0
      %426 = vmatpush1.msra.mxu0 0.0
      %427 = vmatprep.subr.mxu0 0.0
      %428 = vmatpush1.msra.mxu0 0.0
      %429 = vmatprep.subr.mxu0 0.0
      %430 = vmatpush1.msra.mxu0 0.0
      %431 = vmatprep.subr.mxu0 0.0
      %432 = vmatpush1.msra.mxu0 0.0
      %433 = vmatprep.subr.mxu0 0.0
      %434 = vmatpush1.msra.mxu0 0.0
      %435 = vmatprep.subr.mxu0 0.0
      %436 = vmatpush1.msra.mxu0 0.0
      %437 = vmatprep.subr.mxu0 0.0
      %438 = vmatpush1.msra.mxu0 0.0
      %439 = vmatprep.subr.mxu0 0.0
      %440 = vmatpush1.msra.mxu0 0.0
      %441 = vmatprep.subr.mxu0 0.0
      %442 = vmatpush1.msra.mxu0 0.0
      %443 = vmatprep.subr.mxu0 0.0
      %444 = vmatpush1.msra.mxu0 0.0
      %445 = vmatprep.subr.mxu0 0.0
      %446 = vmatpush1.msra.mxu0 0.0
      %447 = vmatprep.subr.mxu0 0.0
      %448 = vmatpush1.msra.mxu0 0.0
      %449 = vmatprep.subr.mxu0 0.0
      %450 = vmatpush1.msra.mxu0 0.0
      %451 = vmatprep.subr.mxu0 0.0
      %452 = vmatpush1.msra.mxu0 0.0
      %453 = vmatprep.subr.mxu0 0.0
      %454 = vmatpush1.msra.mxu0 0.0
      %455 = vmatprep.subr.mxu0 0.0
      %v456 = vand.u32 %v194, 4294901760
      %457 = vmatpush1.msra.mxu0 %v456
      %458 = vmatprep.subr.mxu0 0.0
      %459 = vmatpush2.msra.mxu0 0.0
      %460 = vmatprep.subr.mxu0 0.0
      %461 = vmatpush2.msra.mxu0 0.0
      %462 = vmatprep.subr.mxu0 0.0
      %463 = vmatpush2.msra.mxu0 0.0
      %464 = vmatprep.subr.mxu0 0.0
      %465 = vmatpush2.msra.mxu0 0.0
      %466 = vmatprep.subr.mxu0 0.0
      %467 = vmatpush2.msra.mxu0 0.0
      %468 = vmatprep.subr.mxu0 0.0
      %469 = vmatpush2.msra.mxu0 0.0
      %470 = vmatprep.subr.mxu0 0.0
      %471 = vmatpush2.msra.mxu0 0.0
      %472 = vmatprep.subr.mxu0 0.0
      %473 = vmatpush2.msra.mxu0 0.0
      %474 = vmatprep.subr.mxu0 0.0
      %475 = vmatpush2.msra.mxu0 0.0
      %476 = vmatprep.subr.mxu0 0.0
      %477 = vmatpush2.msra.mxu0 0.0
      %478 = vmatprep.subr.mxu0 0.0
      %479 = vmatpush2.msra.mxu0 0.0
      %480 = vmatprep.subr.mxu0 0.0
      %481 = vmatpush2.msra.mxu0 0.0
      %482 = vmatprep.subr.mxu0 0.0
      %483 = vmatpush2.msra.mxu0 0.0
      %484 = vmatprep.subr.mxu0 0.0
      %485 = vmatpush2.msra.mxu0 0.0
      %486 = vmatprep.subr.mxu0 0.0
      %487 = vmatpush2.msra.mxu0 0.0
      %488 = vmatprep.subr.mxu0 0.0
      %489 = vmatpush2.msra.mxu0 0.0
      %490 = vmatprep.mubr.f32.mxu0 0.0
      %v491 = vand.u32 %v197, 4294901760
      %v492 = vsub.f32 %v197, %v491
      %v493 = vand.u32 %v492, 4294901760
      %494 = vmatmul.mubr.f32.gmra.mxu0 %v493
      %v495 = vpop.f32.mrf.mxu0
      %v496 = vadd.f32 %v422, %v495
      %v497 = vpop.f32.mrf.mxu0
      %498 = vdwg.mxu0
      %499 = vmatprep.subr.mxu0 0.0
      %500 = vmatpush1.msra.mxu0 0.0
      %501 = vmatprep.subr.mxu0 0.0
      %502 = vmatpush1.msra.mxu0 0.0
      %503 = vmatprep.subr.mxu0 0.0
      %504 = vmatpush1.msra.mxu0 0.0
      %505 = vmatprep.subr.mxu0 0.0
      %506 = vmatpush1.msra.mxu0 0.0
      %507 = vmatprep.subr.mxu0 0.0
      %508 = vmatpush1.msra.mxu0 0.0
      %509 = vmatprep.subr.mxu0 0.0
      %510 = vmatpush1.msra.mxu0 0.0
      %511 = vmatprep.subr.mxu0 0.0
      %512 = vmatpush1.msra.mxu0 0.0
      %513 = vmatprep.subr.mxu0 0.0
      %514 = vmatpush1.msra.mxu0 0.0
      %515 = vmatprep.subr.mxu0 0.0
      %516 = vmatpush1.msra.mxu0 0.0
      %517 = vmatprep.subr.mxu0 0.0
      %518 = vmatpush1.msra.mxu0 0.0
      %519 = vmatprep.subr.mxu0 0.0
      %520 = vmatpush1.msra.mxu0 0.0
      %521 = vmatprep.subr.mxu0 0.0
      %522 = vmatpush1.msra.mxu0 0.0
      %523 = vmatprep.subr.mxu0 0.0
      %524 = vmatpush1.msra.mxu0 0.0
      %525 = vmatprep.subr.mxu0 0.0
      %526 = vmatpush1.msra.mxu0 0.0
      %527 = vmatprep.subr.mxu0 0.0
      %528 = vmatpush1.msra.mxu0 0.0
      %529 = vmatprep.subr.mxu0 0.0
      %v530 = vand.u32 %v194, 4294901760
      %v531 = vsub.f32 %v194, %v530
      %v532 = vand.u32 %v531, 4294901760
      %533 = vmatpush1.msra.mxu0 %v532
      %534 = vmatprep.subr.mxu0 0.0
      %535 = vmatpush2.msra.mxu0 0.0
      %536 = vmatprep.subr.mxu0 0.0
      %537 = vmatpush2.msra.mxu0 0.0
      %538 = vmatprep.subr.mxu0 0.0
      %539 = vmatpush2.msra.mxu0 0.0
      %540 = vmatprep.subr.mxu0 0.0
      %541 = vmatpush2.msra.mxu0 0.0
      %542 = vmatprep.subr.mxu0 0.0
      %543 = vmatpush2.msra.mxu0 0.0
      %544 = vmatprep.subr.mxu0 0.0
      %545 = vmatpush2.msra.mxu0 0.0
      %546 = vmatprep.subr.mxu0 0.0
      %547 = vmatpush2.msra.mxu0 0.0
      %548 = vmatprep.subr.mxu0 0.0
      %549 = vmatpush2.msra.mxu0 0.0
      %550 = vmatprep.subr.mxu0 0.0
      %551 = vmatpush2.msra.mxu0 0.0
      %552 = vmatprep.subr.mxu0 0.0
      %553 = vmatpush2.msra.mxu0 0.0
      %554 = vmatprep.subr.mxu0 0.0
      %555 = vmatpush2.msra.mxu0 0.0
      %556 = vmatprep.subr.mxu0 0.0
      %557 = vmatpush2.msra.mxu0 0.0
      %558 = vmatprep.subr.mxu0 0.0
      %559 = vmatpush2.msra.mxu0 0.0
      %560 = vmatprep.subr.mxu0 0.0
      %561 = vmatpush2.msra.mxu0 0.0
      %562 = vmatprep.subr.mxu0 0.0
      %563 = vmatpush2.msra.mxu0 0.0
      %564 = vmatprep.subr.mxu0 0.0
      %565 = vmatpush2.msra.mxu0 0.0
      %566 = vmatprep.mubr.f32.mxu0 0.0
      %v567 = vand.u32 %v197, 4294901760
      %568 = vmatmul.mubr.f32.gmra.mxu0 %v567
      %v569 = vpop.f32.mrf.mxu0
      %v570 = vadd.f32 %v496, %v569
      %v571 = vpop.f32.mrf.mxu0
      %572 = vdwg.mxu0
      %573 = vmatprep.subr.mxu0 0.0
      %574 = vmatpush1.msra.mxu0 0.0
      %575 = vmatprep.subr.mxu0 0.0
      %576 = vmatpush1.msra.mxu0 0.0
      %577 = vmatprep.subr.mxu0 0.0
      %578 = vmatpush1.msra.mxu0 0.0
      %579 = vmatprep.subr.mxu0 0.0
      %580 = vmatpush1.msra.mxu0 0.0
      %581 = vmatprep.subr.mxu0 0.0
      %582 = vmatpush1.msra.mxu0 0.0
      %583 = vmatprep.subr.mxu0 0.0
      %584 = vmatpush1.msra.mxu0 0.0
      %585 = vmatprep.subr.mxu0 0.0
      %586 = vmatpush1.msra.mxu0 0.0
      %587 = vmatprep.subr.mxu0 0.0
      %588 = vmatpush1.msra.mxu0 0.0
      %589 = vmatprep.subr.mxu0 0.0
      %590 = vmatpush1.msra.mxu0 0.0
      %591 = vmatprep.subr.mxu0 0.0
      %592 = vmatpush1.msra.mxu0 0.0
      %593 = vmatprep.subr.mxu0 0.0
      %594 = vmatpush1.msra.mxu0 0.0
      %595 = vmatprep.subr.mxu0 0.0
      %596 = vmatpush1.msra.mxu0 0.0
      %597 = vmatprep.subr.mxu0 0.0
      %598 = vmatpush1.msra.mxu0 0.0
      %599 = vmatprep.subr.mxu0 0.0
      %600 = vmatpush1.msra.mxu0 0.0
      %601 = vmatprep.subr.mxu0 0.0
      %602 = vmatpush1.msra.mxu0 0.0
      %603 = vmatprep.subr.mxu0 0.0
      %v604 = vand.u32 %v194, 4294901760
      %605 = vmatpush1.msra.mxu0 %v604
      %606 = vmatprep.subr.mxu0 0.0
      %607 = vmatpush2.msra.mxu0 0.0
      %608 = vmatprep.subr.mxu0 0.0
      %609 = vmatpush2.msra.mxu0 0.0
      %610 = vmatprep.subr.mxu0 0.0
      %611 = vmatpush2.msra.mxu0 0.0
      %612 = vmatprep.subr.mxu0 0.0
      %613 = vmatpush2.msra.mxu0 0.0
      %614 = vmatprep.subr.mxu0 0.0
      %615 = vmatpush2.msra.mxu0 0.0
      %616 = vmatprep.subr.mxu0 0.0
      %617 = vmatpush2.msra.mxu0 0.0
      %618 = vmatprep.subr.mxu0 0.0
      %619 = vmatpush2.msra.mxu0 0.0
      %620 = vmatprep.subr.mxu0 0.0
      %621 = vmatpush2.msra.mxu0 0.0
      %622 = vmatprep.subr.mxu0 0.0
      %623 = vmatpush2.msra.mxu0 0.0
      %624 = vmatprep.subr.mxu0 0.0
      %625 = vmatpush2.msra.mxu0 0.0
      %626 = vmatprep.subr.mxu0 0.0
      %627 = vmatpush2.msra.mxu0 0.0
      %628 = vmatprep.subr.mxu0 0.0
      %629 = vmatpush2.msra.mxu0 0.0
      %630 = vmatprep.subr.mxu0 0.0
      %631 = vmatpush2.msra.mxu0 0.0
      %632 = vmatprep.subr.mxu0 0.0
      %633 = vmatpush2.msra.mxu0 0.0
      %634 = vmatprep.subr.mxu0 0.0
      %635 = vmatpush2.msra.mxu0 0.0
      %636 = vmatprep.subr.mxu0 0.0
      %637 = vmatpush2.msra.mxu0 0.0
      %638 = vmatprep.mubr.f32.mxu0 0.0
      %v639 = vand.u32 %v197, 4294901760
      %640 = vmatmul.mubr.f32.gmra.mxu0 %v639
      %v641 = vpop.f32.mrf.mxu0
      %v642 = vadd.f32 %v570, %v641
      %v643 = vpop.f32.mrf.mxu0
      %644 = vdwg.mxu0
      %v645 = vld [vmem:[%s2] sm:$0x1]
      %v647 = vlaneseq
      %v648 = vshrl.u32 %v647, 7
      %v649 = vsub.s32 0, %v648
      %v650 = vrot.slane %v645, %v649
      %v652 = vsub.f32 %v642, %v650
      %v653 = vmul.f32 %v652, %v652
      %v654 = vld [vmem:[%s3] sm:$0x1]
      %v656 = vlaneseq
      %v657 = vshrl.u32 %v656, 7
      %v658 = vsub.s32 0, %v657
      %v659 = vrot.slane %v654, %v658
      %v661 = vmul.f32 %v653, %v659
      %v662 = vmul.f32 %v661, 1.442695
      %v663 = vpow.pop %v662
      %664 = vst [vmem:[%s192] sm:$0xff] %v663
      %p665 = scmp.lt.s32.totalorder %s15, 3
      %s666 = scalar_select %p665, %s15, 3
      %s667 = smul.addr %s666, 8
      %s668 = scalar_lea.vmem %s4, %s667
      // Predicated region
      $region37: #{fuzzy_layer.1} parent=35 // pred_check
        %p669 = pneg %p122
      $region38: #{fuzzy_layer.1} parent=35 // pred_check_branch
        %671 = sbr.rel (%p669) target = $region40
      $region39: #{fuzzy_layer.1} parent=35 // pred_region
        _
      $region40: #{fuzzy_layer.1} parent=35 // pred_fallthru
        _
    $region36: #{fuzzy_layer.1} parent=5 // pred_fallthru
      _
    %p672 = scmp.le.s32.totalorder 2, %s10
    // Predicated region
    $region41: #{fuzzy_layer.1} parent=5 // pred_check
      %p673 = pneg %p672
    $region42: #{fuzzy_layer.1} parent=5 // pred_check_branch
      %675 = sbr.rel (%p673) target = $region44
    $region43: #{fuzzy_layer.1} parent=5 // pred_region
      %s676 = ssub.s32 %s10, 2
      // Predicated region
      $region45: #{fuzzy_layer.1} parent=43 // pred_check
        %p677 = pneg %p128
      $region46: #{fuzzy_layer.1} parent=43 // pred_check_branch
        %679 = sbr.rel (%p677) target = $region48
      $region47: #{fuzzy_layer.1} parent=43 // pred_region
        %p680 = scmp.lt.s32.totalorder %s16, 3
        %s681 = scalar_select %p680, %s16, 3
        %s682 = smul.addr %s681, 8
        %s683 = scalar_lea.vmem %s4, %s682
      $region48: #{fuzzy_layer.1} parent=43 // pred_fallthru
        _
    $region44: #{fuzzy_layer.1} parent=5 // pred_fallthru
      _
  $region6: #{fuzzy_layer.1} parent=0 // loop_footer
    %s14 = sadd.s32 1, %s10
  $region7: #{fuzzy_layer.1} parent=0 // loop_footer_branch
    %9 = sbr.rel target = $region3
  $region8: #{fuzzy_layer.1} parent=0 // loop_exit
    _

</llo_original>
